<compile_context>
chip_gen: v7x
topology: tpu7x:2x2x1
jax: 0.10.0
libtpu: 0.0.40
codegen_flags: <defaults>
</compile_context>

<pallas_src>
import functools

import jax
import jax.numpy as jnp
from jax.experimental import pallas as pl
from jax.experimental.pallas import tpu as pltpu


def _round_up(x, m):
    return ((x + m - 1) // m) * m


def _plan(n_rows, hw):
    """Lane tile (multiple of 128, <=1024) and row tile (multiple of 8, <=256)."""
    tile = min(1024, _round_up(hw, 128))
    row_tile = min(_round_up(n_rows, 8), 256)
    return row_tile, tile


def _pool_kernel(x_ref, sums_ref, *, hw, tile):
    """Streaming per-row spatial sum; output block is the resident accumulator."""
    t = pl.program_id(1)
    n_hw = pl.num_programs(1)

    @pl.when(t == 0)
    def _init():
        sums_ref[...] = jnp.zeros_like(sums_ref)

    x = x_ref[...].astype(jnp.float32)            # cast in-kernel (free vs DMA)

    rem = hw % tile                                # static Python int
    if rem != 0:
        # Ragged tail: mask only on the final hw tile (one VPU select, one step).
        @pl.when(t == n_hw - 1)
        def _tail():
            lane = jax.lax.broadcasted_iota(jnp.int32, x.shape, 1)
            xm = jnp.where(lane < rem, x, 0.0)
            sums_ref[...] += jnp.sum(xm, axis=-1, keepdims=True)

        @pl.when(t != n_hw - 1)
        def _body():
            sums_ref[...] += jnp.sum(x, axis=-1, keepdims=True)
    else:
        sums_ref[...] += jnp.sum(x, axis=-1, keepdims=True)


def _broadcast_kernel(feats_ref, out_ref):
    """expand_as(input_): broadcast per-row attention over this spatial tile."""
    f = feats_ref[...].astype(out_ref.dtype)       # (row_tile, 1)
    out_ref[...] = jnp.broadcast_to(f, out_ref.shape)


def channelwise_attention(x_nchw, w1, b1, w2, b2):
    """x_nchw: (B, C, H, W). Returns (attention map (B, C, H, W), ca_act_reg scalar)."""
    B, C, H, W = x_nchw.shape
    HW = H * W
    R = B * C

    row_tile, tile = _plan(R, HW)
    n_rows = pl.cdiv(R, row_tile)
    n_hw = pl.cdiv(HW, tile)

    x2d = x_nchw.reshape(R, HW)                    # free reshape, native dtype

    # ---------- Pass 1: row-parallel streamed spatial reduction ----------
    sums = pl.pallas_call(
        functools.partial(_pool_kernel, hw=HW, tile=tile),
        out_shape=jax.ShapeDtypeStruct((R, 1), jnp.float32),
        grid_spec=pltpu.PrefetchScalarGridSpec(
            num_scalar_prefetch=0,
            grid=(n_rows, n_hw),
            in_specs=[pl.BlockSpec((row_tile, tile), lambda r, t: (r, t))],
            out_specs=pl.BlockSpec((row_tile, 1), lambda r, t: (r, 0)),
        ),
        compiler_params=pltpu.CompilerParams(
            dimension_semantics=("parallel", "arbitrary"),
        ),
    )(x2d)

    # ---------- Tiny MLP + reg on the (B, C) pooled result (plain JAX) ----------
    pooled = sums.reshape(B, C) * jnp.float32(1.0 / HW)           # adaptive_avg_pool2d
    h1 = jnp.maximum(pooled @ w1.astype(jnp.float32) + b1.astype(jnp.float32), 0.0)
    feats = jax.nn.sigmoid(h1 @ w2.astype(jnp.float32) + b2.astype(jnp.float32))
    ca_act_reg = jnp.mean(feats)

    # ---------- Pass 2: lane-dense tiled broadcast, exact (R, HW) output ----------
    out2d = pl.pallas_call(
        _broadcast_kernel,
        out_shape=jax.ShapeDtypeStruct((R, HW), x_nchw.dtype),
        grid_spec=pltpu.PrefetchScalarGridSpec(
            num_scalar_prefetch=0,
            grid=(n_rows, n_hw),
            in_specs=[pl.BlockSpec((row_tile, 1), lambda r, t: (r, 0))],
            out_specs=pl.BlockSpec((row_tile, tile), lambda r, t: (r, t)),
        ),
        compiler_params=pltpu.CompilerParams(
            dimension_semantics=("parallel", "parallel"),
        ),
    )(feats.reshape(R, 1))

    return out2d.reshape(B, C, H, W), ca_act_reg


def _reference(x_nchw, w1, b1, w2, b2):
    # Pure-JAX reference mirroring the PyTorch forward exactly.
    B, C, H, W = x_nchw.shape
    pooled = jnp.mean(x_nchw.astype(jnp.float32), axis=(2, 3))     # (B, C)
    h1 = jax.nn.relu(pooled @ w1 + b1)                             # (B, C//4)
    feats = jax.nn.sigmoid(h1 @ w2 + b2)                           # (B, C)
    reg = jnp.mean(feats)
    out = jnp.broadcast_to(feats[:, :, None, None], (B, C, H, W)).astype(x_nchw.dtype)
    return out, reg


if __name__ == "__main__":
    B, C, H, W = 2, 4, 16, 16
    hidden = C // 4

    key = jax.random.PRNGKey(0)
    kx, kw1, kb1, kw2, kb2 = jax.random.split(key, 5)

    x = jax.random.normal(kx, (B, C, H, W), dtype=jnp.float32)

    # nn.Linear-style init; weights stored pre-transposed as (in, out).
    bound1 = 1.0 / jnp.sqrt(C)
    w1 = jax.random.uniform(kw1, (C, hidden), minval=-bound1, maxval=bound1)
    b1 = jax.random.uniform(kb1, (hidden,), minval=-bound1, maxval=bound1)
    bound2 = 1.0 / jnp.sqrt(hidden)
    w2 = jax.random.uniform(kw2, (hidden, C), minval=-bound2, maxval=bound2)
    b2 = jax.random.uniform(kb2, (C,), minval=-bound2, maxval=bound2)

    out, reg = channelwise_attention(x, w1, b1, w2, b2)
    out = jax.block_until_ready(out)
    reg = jax.block_until_ready(reg)

    ref_out, ref_reg = _reference(x, w1, b1, w2, b2)
    assert out.shape == (B, C, H, W)
    assert jnp.allclose(out, ref_out, atol=1e-5), "feats mismatch"
    assert jnp.allclose(reg, ref_reg, atol=1e-5), "ca_act_reg mismatch"

    # Also exercise the ragged (non-multiple-of-128) spatial tail path.
    H2, W2 = 5, 7
    x2 = jax.random.normal(jax.random.PRNGKey(1), (B, C, H2, W2), dtype=jnp.float32)
    out2, reg2 = channelwise_attention(x2, w1, b1, w2, b2)
    out2 = jax.block_until_ready(out2)
    ref_out2, ref_reg2 = _reference(x2, w1, b1, w2, b2)
    assert jnp.allclose(out2, ref_out2, atol=1e-5), "feats mismatch (ragged HW)"
    assert jnp.allclose(reg2, ref_reg2, atol=1e-5), "ca_act_reg mismatch (ragged HW)"

    # Exercise a partial row block (B*C not a multiple of the row tile) too.
    B3, C3 = 1, 4
    w1_3 = jax.random.uniform(kw1, (C3, 1), minval=-0.5, maxval=0.5)
    b1_3 = jax.random.uniform(kb1, (1,), minval=-0.5, maxval=0.5)
    w2_3 = jax.random.uniform(kw2, (1, C3), minval=-0.5, maxval=0.5)
    b2_3 = jax.random.uniform(kb2, (C3,), minval=-0.5, maxval=0.5)
    x3 = jax.random.normal(jax.random.PRNGKey(2), (B3, C3, 9, 13), dtype=jnp.float32)
    out3, reg3 = channelwise_attention(x3, w1_3, b1_3, w2_3, b2_3)
    out3 = jax.block_until_ready(out3)
    ref_out3, ref_reg3 = _reference(x3, w1_3, b1_3, w2_3, b2_3)
    assert jnp.allclose(out3, ref_out3, atol=1e-5), "feats mismatch (partial row block)"
    assert jnp.allclose(reg3, ref_reg3, atol=1e-5), "ca_act_reg mismatch (partial row block)"

    print("KERNEL_OK")
</pallas_src>

<mosaic_0001>
module attributes {stable_mosaic.version = 11 : i64} {
  func.func @_pool_kernel(%arg0: i32, %arg1: i32, %arg2: memref<8x256xf32, #tpu.memory_space<vmem>>, %arg3: memref<8x1xf32, #tpu.memory_space<vmem>>) attributes {dimension_semantics = [#tpu.dimension_semantics<parallel>, #tpu.dimension_semantics<arbitrary>], iteration_bounds = array<i64: 1, 1>, scalar_prefetch = 0 : i64, scratch_operands = 0 : i64, tpu.core_type = #tpu.core_type<tc>, window_params = [{transform_indices = @transform_0, window_bounds = array<i64: 8, 256>}, {transform_indices = @transform_1, window_bounds = array<i64: 8, 1>}]} {
    %c0_i32 = arith.constant 0 : i32
    %0 = arith.cmpi eq, %arg1, %c0_i32 : i32
    %1 = arith.extui %0 : i1 to i32
    %c0_i32_0 = arith.constant 0 : i32
    %2 = arith.cmpi ne, %1, %c0_i32_0 : i32
    scf.if %2 {
      %cst_6 = arith.constant 0.000000e+00 : f32
      %9 = vector.broadcast %cst_6 : f32 to vector<8x1xf32>
      %c0_7 = arith.constant 0 : index
      %c0_8 = arith.constant 0 : index
      %10 = vector.load %arg3[%c0_7, %c0_8] : memref<8x1xf32, #tpu.memory_space<vmem>>, vector<8x1xf32>
      tpu.vector_store %arg3[%c0_7, %c0_8], %9 {strides = array<i32>} : memref<8x1xf32, #tpu.memory_space<vmem>>, vector<8x1xf32>,
    } else {
    }
    %c0 = arith.constant 0 : index
    %c0_1 = arith.constant 0 : index
    %3 = vector.load %arg2[%c0, %c0_1] : memref<8x256xf32, #tpu.memory_space<vmem>>, vector<8x256xf32>
    %c0_2 = arith.constant 0 : index
    %c0_3 = arith.constant 0 : index
    %4 = vector.load %arg3[%c0_2, %c0_3] : memref<8x1xf32, #tpu.memory_space<vmem>>, vector<8x1xf32>
    %cst = arith.constant dense<0.000000e+00> : vector<8xf32>
    %5 = vector.multi_reduction <add>, %3, %cst [1] : vector<8x256xf32> to vector<8xf32>
    %6 = vector.shape_cast %5 : vector<8xf32> to vector<8x1xf32>
    %7 = arith.addf %4, %6 : vector<8x1xf32>
    %c0_4 = arith.constant 0 : index
    %c0_5 = arith.constant 0 : index
    %8 = vector.load %arg3[%c0_4, %c0_5] : memref<8x1xf32, #tpu.memory_space<vmem>>, vector<8x1xf32>
    tpu.vector_store %arg3[%c0_4, %c0_5], %7 {strides = array<i32>} : memref<8x1xf32, #tpu.memory_space<vmem>>, vector<8x1xf32>,
    return
  }
  func.func @transform_0(%arg0: i32, %arg1: i32) -> (i32, i32) {
    %c0_i32 = arith.constant 0 : i32
    return %arg0, %arg1 : i32, i32
  }
  func.func @transform_1(%arg0: i32, %arg1: i32) -> (i32, i32) {
    %c0_i32 = arith.constant 0 : i32
    %c0_i32_0 = arith.constant 0 : i32
    return %arg0, %c0_i32 : i32, i32
  }
}

</mosaic_0001>

<llo_original>
// kernel: tpu_custom_call.1
$region0: #{tpu_custom_call.1}
  #allocation0 [shape = 'u32[]', space=smem, size = 0x4, offset = 0x4, fixed_abs, tag = 'smem constant byte address 0x4 - core index']
  #allocation1 [shape = 'u32[144,128]{1,0:T(1,128)}', space=vmem, size = 0x12000, scoped, tag = 'internal scratch']
  %s0 = inlined_call_operand.hbm [shape: f32[8,256], index: 0, kind: input, shape index: {}]
  %s1 = inlined_call_operand.vmem [shape: f32[8,1], index: 1, kind: output, shape index: {}]
  %s2 = sld [smem:[#allocation0]]
  $region22: #{tpu_custom_call.1} parent=0
    _
  %s4 = ssub.s32 1, %s2
  %s5 = scalar_select 0, %s4, %s2
  $region1: #{tpu_custom_call.1} parent=0
    #allocation2 [shape = 'u8[8192]{0}', space=vmem, size = 0x2000, scoped, tag = 'input window, operand 0, single buffered']
    #allocation3 [shape = 's32[1]{0}', space=sflag, size = 0x4, scoped, tag = 'scoped memory for tpu_custom_call.1']
    %6 = vsyncpa [#allocation3], 0
    // Predicated region
    $region2: #{tpu_custom_call.1} parent=1 // pred_check
      _
    $region3: #{tpu_custom_call.1} parent=1 // pred_check_branch
      %8 = sbr.rel (0) target = $region5
    $region4: #{tpu_custom_call.1} parent=1 // pred_region
      %s10 = ssub.s32 256, 256
      %11 = vsyncadd [#allocation3], %s10
      %s13 = sshll.u32 [#allocation2], 4
      %s14 = int_to_ptr.vmem [resolvable:$true] %s13
      %16 = dma.hbm_to_vmem [thread:$0]  %s0, 256, %s14, [#allocation3]
    $region5: #{tpu_custom_call.1} parent=1 // pred_fallthru
      _
    // Predicated region
    $region6: #{tpu_custom_call.1} parent=1 // pred_check
      _
    $region7: #{tpu_custom_call.1} parent=1 // pred_check_branch
      %18 = sbr.rel (0) target = $region9
    $region8: #{tpu_custom_call.1} parent=1 // pred_region
      %19 = dma.done [#allocation3], 256
    $region9: #{tpu_custom_call.1} parent=1 // pred_fallthru
      _
    %p20 = scmp.eq.s32.totalorder 0, 0
    // Predicated region
    $region10: #{tpu_custom_call.1} parent=1 // pred_check
      %p21 = pneg %p20
    $region11: #{tpu_custom_call.1} parent=1 // pred_check_branch
      %23 = sbr.rel (%p21) target = $region13
    $region12: #{tpu_custom_call.1} parent=1 // pred_region
      %vm24 = vcmask 7168
      %25 = vst.msk [vmem:[%s1] sm:$0xff] %vm24, 0.0
    $region13: #{tpu_custom_call.1} parent=1 // pred_fallthru
      _
    %v26 = vld [vmem:[#allocation2] sm:$0xff]
    %v27 = vld [vmem:[#allocation2 + $0x8] sm:$0xff]
    %v28 = vld [vmem:[%s1] sm:$0xff]
    %v29 = vadd.f32 %v26, %v27
    %30 = vadd.xlane.f32.xlu0 %v29
    %v31 = vpop.xlane.xlu0 %30
    %v32 = vadd.f32 %v28, %v31
    %vm33 = vcmask 7168
    %34 = vst.msk [vmem:[%s1] sm:$0xff] %vm33, %v32
    // Predicated region
    $region14: #{tpu_custom_call.1} parent=1 // pred_check
      _
    $region15: #{tpu_custom_call.1} parent=1 // pred_check_branch
      %36 = sbr.rel (0) target = $region17
    $region16: #{tpu_custom_call.1} parent=1 // pred_region
      _
    $region17: #{tpu_custom_call.1} parent=1 // pred_fallthru
      _
    // Predicated region
    $region18: #{tpu_custom_call.1} parent=1 // pred_check
      _
    $region19: #{tpu_custom_call.1} parent=1 // pred_check_branch
      %38 = sbr.rel (0) target = $region21
    $region20: #{tpu_custom_call.1} parent=1 // pred_region
      _
    $region21: #{tpu_custom_call.1} parent=1 // pred_fallthru
      _
    %39 = vsyncpa [#allocation3], 1

</llo_original>
